<compile_context>
chip_gen: v7x
topology: tpu7x:2x2x1
jax: 0.10.0
libtpu: 0.0.40
codegen_flags: <defaults>
</compile_context>

<pallas_src>
import jax
import jax.numpy as jnp
from jax import lax
from jax.experimental import pallas as pl
from jax.experimental.pallas import tpu as pltpu


def prepare_qkv_params(wq, wk, wv, bq, bk, bv):
    """One-time static parameter transform.

    Fuses the three projections into a single (D, 3D) weight / (1, 3D) bias and
    folds 1/temperature into the Q slice so no per-element scale is needed in
    the hot loop.
    """
    D = wq.shape[0]
    inv_temp = jnp.float32(1.0 / (float(D) ** 0.5))
    wqkv = jnp.concatenate([wq * inv_temp, wk, wv], axis=1)   # (D, 3D)
    bqkv = jnp.concatenate([bq * inv_temp, bk, bv], axis=1)   # (1, 3D)
    return wqkv, bqkv


def _tensorcores_per_chip():
    """Best-effort TensorCores-per-chip (2 on v7x, 1 on v5e/v6e). Safe fallback: 1."""
    try:
        dev = jax.devices()[0]
        n = getattr(dev, "num_cores", None)
        if isinstance(n, int) and n > 0:
            return max(1, min(2, n))
        kind = str(getattr(dev, "device_kind", "")).lower()
        if "v7" in kind:
            return 2
    except Exception:
        pass
    return 1


def _pick_grid(B, S, requested_blocks=None):
    """Pick (num_blocks, block_batch).

    nb > 1 is only used when it matches available TensorCores AND the resulting
    block shapes are legal ((bt*S) % 8 == 0, B % nb == 0); otherwise collapse to
    a single full-array step (always legal, minimal per-step overhead).
    """
    cores = requested_blocks if requested_blocks is not None else _tensorcores_per_chip()
    for nb in range(min(max(1, cores), B), 0, -1):
        if B % nb:
            continue
        bt = B // nb
        if nb == 1 or (bt * S) % 8 == 0:
            return nb, bt
    return 1, B


def _make_kernel(bt, S, D):
    """Kernel handling `bt` independent (S, D) sequences per grid step."""

    def kernel(x_ref, w_ref, b_ref, o_ref):
        x = x_ref[...]                                              # (bt*S, D)

        # Fused QKV projection for every sequence in this block: one MXU matmul.
        qkv = jnp.dot(x, w_ref[...],
                      preferred_element_type=jnp.float32) + b_ref[...]  # (bt*S, 3D)

        # Exactly three lane slices (hoisted out of any per-sequence loop),
        # then view each as a (bt, S, D) batch for batched attention matmuls.
        q = qkv[:, 0:D].reshape(bt, S, D)          # 1/temperature already folded in
        k = qkv[:, D:2 * D].reshape(bt, S, D)
        v = qkv[:, 2 * D:3 * D].reshape(bt, S, D)

        # Batched scores: contract the last (feature) dims, batch over sequences.
        # No k transpose / cross-lane relayout.
        scores = jnp.einsum("bqd,bkd->bqk", q, k,
                            preferred_element_type=jnp.float32)    # (bt, S, S)

        # Numerically-stable softmax. Approximate reciprocal on the EUP plus one
        # Newton refinement keeps relative error ~1e-7 (well inside 1e-5).
        m = jnp.max(scores, axis=-1, keepdims=True)
        e = jnp.exp(scores - m)
        denom = jnp.sum(e, axis=-1, keepdims=True)
        r = pl.reciprocal(denom, approx=True)
        r = r * (2.0 - denom * r)                                   # Newton-Raphson step
        attn = e * r

        # TODO(synk): nn.Dropout(0.1) is identity in eval mode; training-mode
        # stochastic dropout is intentionally not applied here.

        out = jnp.einsum("bqk,bkd->bqd", attn, v,
                         preferred_element_type=jnp.float32)        # (bt, S, D)

        # Same row-major layout as the input: no transpose anywhere downstream.
        o_ref[...] = out.reshape(bt * S, D).astype(o_ref.dtype)

    return kernel


def self_attention_batched(x, wqkv, bqkv, *, num_blocks=None):
    """x: (B, S, D) f32; wqkv: (D, 3D); bqkv: (1, 3D). Returns (B, S, D)."""
    B, S, D = x.shape
    assert wqkv.shape == (D, 3 * D) and bqkv.shape == (1, 3 * D)

    nb, bt = _pick_grid(B, S, num_blocks)

    # Flatten batch into rows so the fused QKV matmul covers the whole block.
    x_rows = x.reshape(B * S, D)

    out_rows = pl.pallas_call(
        _make_kernel(bt, S, D),
        out_shape=jax.ShapeDtypeStruct((B * S, D), x.dtype),
        grid=(nb,),
        in_specs=[
            pl.BlockSpec((bt * S, D), lambda b: (b, 0),
                         memory_space=pltpu.MemorySpace.VMEM),      # x rows
            pl.BlockSpec((D, 3 * D), lambda b: (0, 0),
                         memory_space=pltpu.MemorySpace.VMEM),      # fused weights
            pl.BlockSpec((1, 3 * D), lambda b: (0, 0),
                         memory_space=pltpu.MemorySpace.VMEM),      # fused bias
        ],
        out_specs=pl.BlockSpec((bt * S, D), lambda b: (b, 0),
                               memory_space=pltpu.MemorySpace.VMEM),
        compiler_params=pltpu.CompilerParams(
            dimension_semantics=("parallel",)),
        # Note: at these sizes the default VMEM budget is ample; set
        # vmem_limit_bytes explicitly only when scaling bt/S/D up (v7x has
        # 64 MiB physical VMEM vs 128 MiB on v5e/v6e).
    )(x_rows, wqkv, bqkv)

    # (B*S, D) -> (B, S, D): pure view, no transpose.
    return out_rows.reshape(B, S, D)


def self_attention(x, wqkv, bqkv):
    """2-D entry point matching the PyTorch module: x (S, D) -> (S, D)."""
    return self_attention_batched(x[None], wqkv, bqkv)[0]


def _reference(x, wq, wk, wv, bq, bk, bv):
    """Pure-JAX reference mirroring the PyTorch forward (eval mode)."""
    D = x.shape[-1]
    temperature = float(D) ** 0.5
    q = x @ wq + bq
    k = x @ wk + bk
    v = x @ wv + bv
    attn = (q / temperature) @ k.T
    attn = jax.nn.softmax(attn, axis=-1)
    return attn @ v


if __name__ == "__main__":
    key = jax.random.PRNGKey(0)
    S, D = 8, 32      # seq (number of [CLS] tokens), d_model
    B = 8             # batch of independent sequences for the batched path

    keys = jax.random.split(key, 9)
    x2d = jax.random.normal(keys[0], (S, D), dtype=jnp.float32)
    xb = jax.random.normal(keys[7], (B, S, D), dtype=jnp.float32)

    # Deterministic parameter init (synthetic, kaiming-ish scale).
    scale = 1.0 / (D ** 0.5)
    wq = jax.random.uniform(keys[1], (D, D), jnp.float32, -scale, scale)
    wk = jax.random.uniform(keys[2], (D, D), jnp.float32, -scale, scale)
    wv = jax.random.uniform(keys[3], (D, D), jnp.float32, -scale, scale)
    bq = jax.random.uniform(keys[4], (1, D), jnp.float32, -scale, scale)
    bk = jax.random.uniform(keys[5], (1, D), jnp.float32, -scale, scale)
    bv = jax.random.uniform(keys[6], (1, D), jnp.float32, -scale, scale)

    # One-time static parameter preparation (fusion + temperature fold).
    wqkv, bqkv = prepare_qkv_params(wq, wk, wv, bq, bk, bv)

    # 1) 2-D path: exactly the original module's forward signature.
    out2d = jax.block_until_ready(self_attention(x2d, wqkv, bqkv))
    ref2d = _reference(x2d, wq, wk, wv, bq, bk, bv)
    assert out2d.shape == (S, D), out2d.shape
    assert jnp.allclose(out2d, ref2d, atol=1e-5, rtol=1e-5), \
        float(jnp.max(jnp.abs(out2d - ref2d)))

    # 2) Batched path: generation-aware grid (1 step on v5e/v6e, 2 on v7x).
    outb = jax.block_until_ready(self_attention_batched(xb, wqkv, bqkv))
    refb = jax.vmap(lambda xx: _reference(xx, wq, wk, wv, bq, bk, bv))(xb)
    assert outb.shape == (B, S, D), outb.shape
    assert jnp.allclose(outb, refb, atol=1e-5, rtol=1e-5), \
        float(jnp.max(jnp.abs(outb - refb)))

    print("KERNEL_OK")
</pallas_src>

<mosaic_0001>
module attributes {stable_mosaic.version = 11 : i64} {
  func.func @kernel(%arg0: i32, %arg1: memref<8x32xf32, #tpu.memory_space<vmem>>, %arg2: memref<32x96xf32, #tpu.memory_space<vmem>>, %arg3: memref<1x96xf32, #tpu.memory_space<vmem>>, %arg4: memref<8x32xf32, #tpu.memory_space<vmem>>) attributes {dimension_semantics = [#tpu.dimension_semantics<parallel>], iteration_bounds = array<i64: 1>, scalar_prefetch = 0 : i64, scratch_operands = 0 : i64, tpu.core_type = #tpu.core_type<tc>, window_params = [{transform_indices = @transform_0, window_bounds = array<i64: 8, 32>}, {pipeline_mode = #tpu.pipeline_mode<synchronous>, transform_indices = @transform_1, window_bounds = array<i64: 32, 96>}, {pipeline_mode = #tpu.pipeline_mode<synchronous>, transform_indices = @transform_2, window_bounds = array<i64: 1, 96>}, {transform_indices = @transform_3, window_bounds = array<i64: 8, 32>}]} {
    %c0 = arith.constant 0 : index
    %c0_0 = arith.constant 0 : index
    %0 = vector.load %arg1[%c0, %c0_0] : memref<8x32xf32, #tpu.memory_space<vmem>>, vector<8x32xf32>
    %c0_1 = arith.constant 0 : index
    %c0_2 = arith.constant 0 : index
    %1 = vector.load %arg2[%c0_1, %c0_2] : memref<32x96xf32, #tpu.memory_space<vmem>>, vector<32x96xf32>
    %cst = arith.constant dense<0.000000e+00> : vector<8x96xf32>
    %2 = tpu.matmul %0, %1, %cst {dimension_numbers = #tpu.dot_dimension_numbers<[1], [0], [0], [1], [0, 0, 1, 1], [], []>} : vector<8x32xf32>, vector<32x96xf32>, vector<8x96xf32> -> vector<8x96xf32>
    %c0_3 = arith.constant 0 : index
    %c0_4 = arith.constant 0 : index
    %3 = vector.load %arg3[%c0_3, %c0_4] : memref<1x96xf32, #tpu.memory_space<vmem>>, vector<1x96xf32>
    %4 = vector.broadcast %3 : vector<1x96xf32> to vector<8x96xf32>
    %5 = arith.addf %2, %4 : vector<8x96xf32>
    %6 = vector.extract_strided_slice %5 {offsets = [0, 0], sizes = [8, 32], strides = [1, 1]} : vector<8x96xf32> to vector<8x32xf32>
    %7 = vector.shape_cast %6 : vector<8x32xf32> to vector<1x8x32xf32>
    %8 = vector.extract_strided_slice %5 {offsets = [0, 32], sizes = [8, 32], strides = [1, 1]} : vector<8x96xf32> to vector<8x32xf32>
    %9 = vector.shape_cast %8 : vector<8x32xf32> to vector<1x8x32xf32>
    %10 = vector.extract_strided_slice %5 {offsets = [0, 64], sizes = [8, 32], strides = [1, 1]} : vector<8x96xf32> to vector<8x32xf32>
    %11 = vector.shape_cast %10 : vector<8x32xf32> to vector<1x8x32xf32>
    "tpu.trace_start"() <{level = 10 : i32, message = "bqd,bkd->bqk"}> : () -> ()
    %cst_5 = arith.constant dense<0.000000e+00> : vector<1x8x8xf32>
    %12 = tpu.matmul %7, %9, %cst_5 {dimension_numbers = #tpu.dot_dimension_numbers<[2], [2], [1], [1], [0, 0, 0, 1, 1, 1], [0], [0]>} : vector<1x8x32xf32>, vector<1x8x32xf32>, vector<1x8x8xf32> -> vector<1x8x8xf32>
    "tpu.trace_stop"() : () -> ()
    %cst_6 = arith.constant dense<0xFF800000> : vector<1x8xf32>
    %13 = vector.multi_reduction <maximumf>, %12, %cst_6 [2] : vector<1x8x8xf32> to vector<1x8xf32>
    %14 = vector.shape_cast %13 : vector<1x8xf32> to vector<1x8x1xf32>
    %15 = vector.broadcast %14 : vector<1x8x1xf32> to vector<1x8x8xf32>
    %16 = arith.subf %12, %15 : vector<1x8x8xf32>
    %17 = math.exp %16 : vector<1x8x8xf32>
    %cst_7 = arith.constant dense<0.000000e+00> : vector<1x8xf32>
    %18 = vector.multi_reduction <add>, %17, %cst_7 [2] : vector<1x8x8xf32> to vector<1x8xf32>
    %19 = vector.shape_cast %18 : vector<1x8xf32> to vector<1x8x1xf32>
    %20 = tpu.reciprocal %19 {approx = true} : vector<1x8x1xf32> -> vector<1x8x1xf32>
    %21 = arith.mulf %19, %20 : vector<1x8x1xf32>
    %cst_8 = arith.constant 2.000000e+00 : f32
    %22 = vector.broadcast %cst_8 : f32 to vector<1x8x1xf32>
    %23 = arith.subf %22, %21 : vector<1x8x1xf32>
    %24 = arith.mulf %20, %23 : vector<1x8x1xf32>
    %25 = vector.broadcast %24 : vector<1x8x1xf32> to vector<1x8x8xf32>
    %26 = arith.mulf %17, %25 : vector<1x8x8xf32>
    "tpu.trace_start"() <{level = 10 : i32, message = "bqk,bkd->bqd"}> : () -> ()
    %cst_9 = arith.constant dense<0.000000e+00> : vector<1x8x32xf32>
    %27 = tpu.matmul %26, %11, %cst_9 {dimension_numbers = #tpu.dot_dimension_numbers<[2], [1], [1], [2], [0, 0, 0, 1, 1, 2], [0], [0]>} : vector<1x8x8xf32>, vector<1x8x32xf32>, vector<1x8x32xf32> -> vector<1x8x32xf32>
    "tpu.trace_stop"() : () -> ()
    %28 = vector.shape_cast %27 : vector<1x8x32xf32> to vector<8x32xf32>
    %c0_10 = arith.constant 0 : index
    %c0_11 = arith.constant 0 : index
    %29 = vector.load %arg4[%c0_10, %c0_11] : memref<8x32xf32, #tpu.memory_space<vmem>>, vector<8x32xf32>
    tpu.vector_store %arg4[%c0_10, %c0_11], %28 {strides = array<i32>} : memref<8x32xf32, #tpu.memory_space<vmem>>, vector<8x32xf32>,
    return
  }
  func.func @transform_0(%arg0: i32) -> (i32, i32) {
    %c0_i32 = arith.constant 0 : i32
    %c0_i32_0 = arith.constant 0 : i32
    return %arg0, %c0_i32 : i32, i32
  }
  func.func @transform_1(%arg0: i32) -> (i32, i32) {
    %c0_i32 = arith.constant 0 : i32
    %c0_i32_0 = arith.constant 0 : i32
    %c0_i32_1 = arith.constant 0 : i32
    return %c0_i32, %c0_i32_0 : i32, i32
  }
  func.func @transform_2(%arg0: i32) -> (i32, i32) {
    %c0_i32 = arith.constant 0 : i32
    %c0_i32_0 = arith.constant 0 : i32
    %c0_i32_1 = arith.constant 0 : i32
    return %c0_i32, %c0_i32_0 : i32, i32
  }
  func.func @transform_3(%arg0: i32) -> (i32, i32) {
    %c0_i32 = arith.constant 0 : i32
    %c0_i32_0 = arith.constant 0 : i32
    return %arg0, %c0_i32 : i32, i32
  }
}

</mosaic_0001>

<llo_original>
// kernel: tpu_custom_call.1
$region0: #{tpu_custom_call.1}
  #allocation0 [shape = 'u32[]', space=smem, size = 0x4, offset = 0x4, fixed_abs, tag = 'smem constant byte address 0x4 - core index']
  #allocation1 [shape = 'u32[144,128]{1,0:T(1,128)}', space=vmem, size = 0x12000, scoped, tag = 'internal scratch']
  %s0 = inlined_call_operand.hbm [shape: f32[8,32], index: 0, kind: input, shape index: {}]
  %s1 = inlined_call_operand.hbm [shape: f32[32,96], index: 1, kind: input, shape index: {}]
  %s2 = inlined_call_operand.vmem [shape: f32[1,96], index: 2, kind: input, shape index: {}]
  %s3 = inlined_call_operand.hbm [shape: f32[8,32], index: 3, kind: output, shape index: {}]
  %s4 = sld [smem:[#allocation0]]
  $region30: #{tpu_custom_call.1} parent=0
    _
  %s6 = ssub.s32 1, %s4
  %s7 = scalar_select 0, %s6, %s4
  $region1: #{tpu_custom_call.1} parent=0
    #allocation2 [shape = 'u8[4096]{0}', space=vmem, size = 0x1000, scoped, tag = 'input window, operand 0, single buffered']
    #allocation3 [shape = 's32[1]{0}', space=sflag, size = 0x4, scoped, tag = 'scoped memory for tpu_custom_call.1']
    #allocation4 [shape = 's32[1]{0}', space=sflag, size = 0x4, scoped, tag = 'scoped memory for tpu_custom_call.1']
    #allocation5 [shape = 'u8[16384]{0}', space=vmem, size = 0x4000, scoped, tag = 'input window, operand 1, single buffered']
    #allocation6 [shape = 's32[1]{0}', space=sflag, size = 0x4, scoped, tag = 'scoped memory for tpu_custom_call.1']
    #allocation7 [shape = 'u8[4096]{0}', space=vmem, size = 0x1000, scoped, tag = 'output window, operand 0, single buffered']
    %8 = vsyncpa [#allocation3], 0
    %9 = vsyncpa [#allocation6], 0
    %10 = vsyncpa [#allocation4], 0
    // Predicated region
    $region2: #{tpu_custom_call.1} parent=1 // pred_check
      _
    $region3: #{tpu_custom_call.1} parent=1 // pred_check_branch
      %12 = sbr.rel (0) target = $region5
    $region4: #{tpu_custom_call.1} parent=1 // pred_region
      %s14 = ssub.s32 128, 128
      %15 = vsyncadd [#allocation3], %s14
      %s17 = sshll.u32 [#allocation2], 4
      %s18 = int_to_ptr.vmem [resolvable:$true] %s17
      %20 = dma.hbm_to_vmem [thread:$0]  %s0, 128, %s18, [#allocation3]
    $region5: #{tpu_custom_call.1} parent=1 // pred_fallthru
      _
    // Predicated region
    $region6: #{tpu_custom_call.1} parent=1 // pred_check
      _
    $region7: #{tpu_custom_call.1} parent=1 // pred_check_branch
      %22 = sbr.rel (0) target = $region9
    $region8: #{tpu_custom_call.1} parent=1 // pred_region
      %s24 = ssub.s32 512, 512
      %25 = vsyncadd [#allocation6], %s24
      %s26 = sshll.u32 [#allocation5], 4
      %s27 = int_to_ptr.vmem [resolvable:$true] %s26
      %32 = dma.hbm_to_vmem [thread:$0]  %s1, 512, %s27, [#allocation6], 128, 128, 8
    $region9: #{tpu_custom_call.1} parent=1 // pred_fallthru
      _
    // Predicated region
    $region10: #{tpu_custom_call.1} parent=1 // pred_check
      _
    $region11: #{tpu_custom_call.1} parent=1 // pred_check_branch
      %34 = sbr.rel (0) target = $region13
    $region12: #{tpu_custom_call.1} parent=1 // pred_region
      _
    $region13: #{tpu_custom_call.1} parent=1 // pred_fallthru
      _
    // Predicated region
    $region14: #{tpu_custom_call.1} parent=1 // pred_check
      _
    $region15: #{tpu_custom_call.1} parent=1 // pred_check_branch
      %36 = sbr.rel (0) target = $region17
    $region16: #{tpu_custom_call.1} parent=1 // pred_region
      %37 = dma.done [#allocation3], 128
    $region17: #{tpu_custom_call.1} parent=1 // pred_fallthru
      _
    // Predicated region
    $region18: #{tpu_custom_call.1} parent=1 // pred_check
      _
    $region19: #{tpu_custom_call.1} parent=1 // pred_check_branch
      %39 = sbr.rel (0) target = $region21
    $region20: #{tpu_custom_call.1} parent=1 // pred_region
      %40 = dma.done [#allocation6], 512
    $region21: #{tpu_custom_call.1} parent=1 // pred_fallthru
      _
    %v41 = vld [vmem:[#allocation2] sm:$0xff]
    %v42 = vld [vmem:[#allocation5] sm:$0xff]
    %v43 = vld [vmem:[#allocation5 + $0x8] sm:$0xff]
    %v44 = vld [vmem:[#allocation5 + $0x10] sm:$0xff]
    %v45 = vld [vmem:[#allocation5 + $0x18] sm:$0xff]
    %v46 = vld [vmem:[%s2] sm:$0x1]
    %v48 = vlaneseq
    %v49 = vshrl.u32 %v48, 7
    %v50 = vsub.s32 0, %v49
    %v51 = vrot.slane %v46, %v50
    %vm53 = vcmask 261120
    %v55 = vsel %vm53, %v41, 0
    %57 = vmatprep.subr.mxu0 0.0
    %58 = vmatpush1.msra.mxu0 %v42
    %59 = vmatprep.subr.mxu0 0.0
    %60 = vmatpush1.msra.mxu0 %v43
    %61 = vmatprep.subr.mxu0 0.0
    %62 = vmatpush1.msra.mxu0 %v44
    %63 = vmatprep.subr.mxu0 0.0
    %64 = vmatpush1.msra.mxu0 %v45
    %65 = vmatprep.subr.mxu0 0.0
    %66 = vmatpush1.msra.mxu0 0.0
    %67 = vmatprep.subr.mxu0 0.0
    %68 = vmatpush1.msra.mxu0 0.0
    %69 = vmatprep.subr.mxu0 0.0
    %70 = vmatpush1.msra.mxu0 0.0
    %71 = vmatprep.subr.mxu0 0.0
    %72 = vmatpush1.msra.mxu0 0.0
    %73 = vmatprep.subr.mxu0 0.0
    %74 = vmatpush1.msra.mxu0 0.0
    %75 = vmatprep.subr.mxu0 0.0
    %76 = vmatpush1.msra.mxu0 0.0
    %77 = vmatprep.subr.mxu0 0.0
    %78 = vmatpush1.msra.mxu0 0.0
    %79 = vmatprep.subr.mxu0 0.0
    %80 = vmatpush1.msra.mxu0 0.0
    %81 = vmatprep.subr.mxu0 0.0
    %82 = vmatpush1.msra.mxu0 0.0
    %83 = vmatprep.subr.mxu0 0.0
    %84 = vmatpush1.msra.mxu0 0.0
    %85 = vmatprep.subr.mxu0 0.0
    %86 = vmatpush1.msra.mxu0 0.0
    %87 = vmatprep.subr.mxu0 0.0
    %88 = vmatpush1.msra.mxu0 0.0
    %89 = vmatprep.subr.mxu0 0.0
    %90 = vmatpush1.msra.mxu0 0.0
    %91 = vmatprep.subr.mxu0 0.0
    %92 = vmatpush1.msra.mxu0 0.0
    %93 = vmatprep.subr.mxu0 0.0
    %94 = vmatpush1.msra.mxu0 0.0
    %95 = vmatprep.subr.mxu0 0.0
    %96 = vmatpush1.msra.mxu0 0.0
    %97 = vmatprep.subr.mxu0 0.0
    %98 = vmatpush1.msra.mxu0 0.0
    %99 = vmatprep.subr.mxu0 0.0
    %100 = vmatpush1.msra.mxu0 0.0
    %101 = vmatprep.subr.mxu0 0.0
    %102 = vmatpush1.msra.mxu0 0.0
    %103 = vmatprep.subr.mxu0 0.0
    %104 = vmatpush1.msra.mxu0 0.0
    %105 = vmatprep.subr.mxu0 0.0
    %106 = vmatpush1.msra.mxu0 0.0
    %107 = vmatprep.subr.mxu0 0.0
    %108 = vmatpush1.msra.mxu0 0.0
    %109 = vmatprep.subr.mxu0 0.0
    %110 = vmatpush1.msra.mxu0 0.0
    %111 = vmatprep.subr.mxu0 0.0
    %112 = vmatpush1.msra.mxu0 0.0
    %113 = vmatprep.subr.mxu0 0.0
    %114 = vmatpush1.msra.mxu0 0.0
    %115 = vmatprep.subr.mxu0 0.0
    %116 = vmatpush1.msra.mxu0 0.0
    %117 = vmatprep.subr.mxu0 0.0
    %118 = vmatpush1.msra.mxu0 0.0
    %119 = vmatprep.subr.mxu0 0.0
    %120 = vmatpush1.msra.mxu0 0.0
    %121 = vmatprep.mubr.f32.mxu0 0.0
    %122 = vmatmul.mubr.f32.gmra.mrb[0].mxu0 %v55
    %v123 = vpop.f32.mrb[0].mxu0
    %v124 = vadd.f32 %v51, %v123
    %v125 = vpop.f32.mrb[0].mxu0
    %126 = vdwg.mxu0
    %128 = vrot.lane.b32.xlu0 %v124, 96
    %v129 = vpop.permute.xlu0 %128
    %v130 = vsel %vm53, %v124, 0
    %v132 = vsel %vm53, %v129, 0
    %134 = vmatprep.subr.mxu0 0.0
    %135 = vmatpush1.xpose.msra.mxu0 %v132
    %136 = vmatprep.subr.mxu0 0.0
    %137 = vmatpush1.xpose.msra.mxu0 0.0
    %138 = vmatprep.subr.mxu0 0.0
    %139 = vmatpush1.xpose.msra.mxu0 0.0
    %140 = vmatprep.subr.mxu0 0.0
    %141 = vmatpush1.xpose.msra.mxu0 0.0
    %142 = vmatprep.subr.mxu0 0.0
    %143 = vmatpush1.xpose.msra.mxu0 0.0
    %144 = vmatprep.subr.mxu0 0.0
    %145 = vmatpush1.xpose.msra.mxu0 0.0
    %146 = vmatprep.subr.mxu0 0.0
    %147 = vmatpush1.xpose.msra.mxu0 0.0
    %148 = vmatprep.subr.mxu0 0.0
    %149 = vmatpush1.xpose.msra.mxu0 0.0
    %150 = vmatprep.subr.mxu0 0.0
    %151 = vmatpush1.xpose.msra.mxu0 0.0
    %152 = vmatprep.subr.mxu0 0.0
    %153 = vmatpush1.xpose.msra.mxu0 0.0
    %154 = vmatprep.subr.mxu0 0.0
    %155 = vmatpush1.xpose.msra.mxu0 0.0
    %156 = vmatprep.subr.mxu0 0.0
    %157 = vmatpush1.xpose.msra.mxu0 0.0
    %158 = vmatprep.subr.mxu0 0.0
    %159 = vmatpush1.xpose.msra.mxu0 0.0
    %160 = vmatprep.subr.mxu0 0.0
    %161 = vmatpush1.xpose.msra.mxu0 0.0
    %162 = vmatprep.subr.mxu0 0.0
    %163 = vmatpush1.xpose.msra.mxu0 0.0
    %164 = vmatprep.subr.mxu0 0.0
    %165 = vmatpush1.xpose.msra.mxu0 0.0
    %166 = vmatprep.subr.mxu0 0.0
    %167 = vmatpush1.xpose.msra.mxu0 0.0
    %168 = vmatprep.subr.mxu0 0.0
    %169 = vmatpush1.xpose.msra.mxu0 0.0
    %170 = vmatprep.subr.mxu0 0.0
    %171 = vmatpush1.xpose.msra.mxu0 0.0
    %172 = vmatprep.subr.mxu0 0.0
    %173 = vmatpush1.xpose.msra.mxu0 0.0
    %174 = vmatprep.subr.mxu0 0.0
    %175 = vmatpush1.xpose.msra.mxu0 0.0
    %176 = vmatprep.subr.mxu0 0.0
    %177 = vmatpush1.xpose.msra.mxu0 0.0
    %178 = vmatprep.subr.mxu0 0.0
    %179 = vmatpush1.xpose.msra.mxu0 0.0
    %180 = vmatprep.subr.mxu0 0.0
    %181 = vmatpush1.xpose.msra.mxu0 0.0
    %182 = vmatprep.subr.mxu0 0.0
    %183 = vmatpush1.xpose.msra.mxu0 0.0
    %184 = vmatprep.subr.mxu0 0.0
    %185 = vmatpush1.xpose.msra.mxu0 0.0
    %186 = vmatprep.subr.mxu0 0.0
    %187 = vmatpush1.xpose.msra.mxu0 0.0
    %188 = vmatprep.subr.mxu0 0.0
    %189 = vmatpush1.xpose.msra.mxu0 0.0
    %190 = vmatprep.subr.mxu0 0.0
    %191 = vmatpush1.xpose.msra.mxu0 0.0
    %192 = vmatprep.subr.mxu0 0.0
    %193 = vmatpush1.xpose.msra.mxu0 0.0
    %194 = vmatprep.subr.mxu0 0.0
    %195 = vmatpush1.xpose.msra.mxu0 0.0
    %196 = vmatprep.subr.mxu0 0.0
    %197 = vmatpush1.xpose.msra.mxu0 0.0
    %198 = vmatprep.mubr.f32.mxu0 0.0
    %199 = vmatmul.mubr.f32.gmra.mrb[0].mxu0 %v130
    %v200 = vpop.f32.mrb[0].mxu0
    %v201 = vadd.f32 0.0, %v200
    %v202 = vpop.f32.mrb[0].mxu0
    %203 = vdwg.mxu0
    %vm204 = vcmask 64512
    %v205 = vsel %vm204, %v201, -inf
    %206 = vmax.xlane.f32.xlu0 %v205
    %v207 = vpop.xlane.xlu0 %206
    %v208 = vsub.f32 %v201, %v207
    %v209 = vmul.f32 %v208, 1.442695
    %v210 = vpow.pop %v209
    %v211 = vsel %vm204, %v210, 0.0
    %212 = vadd.xlane.f32.xlu0 %v211
    %v213 = vpop.xlane.xlu0 %212
    %v214 = vrcp.pop %v213
    %v215 = vmul.f32 %v213, %v214
    %v216 = vsub.f32 2.0, %v215
    %v217 = vmul.f32 %v214, %v216
    %v218 = vmul.f32 %v210, %v217
    %219 = vrot.lane.b32.xlu0 %v124, 64
    %v220 = vpop.permute.xlu0 %219
    %v223 = vsel %vm204, %v218, 0
    %225 = vmatprep.subr.mxu0 0.0
    %226 = vmatpush1.msra.mxu0 %v220
    %227 = vmatprep.subr.mxu0 0.0
    %228 = vmatpush1.msra.mxu0 0.0
    %229 = vmatprep.subr.mxu0 0.0
    %230 = vmatpush1.msra.mxu0 0.0
    %231 = vmatprep.subr.mxu0 0.0
    %232 = vmatpush1.msra.mxu0 0.0
    %233 = vmatprep.subr.mxu0 0.0
    %234 = vmatpush1.msra.mxu0 0.0
    %235 = vmatprep.subr.mxu0 0.0
    %236 = vmatpush1.msra.mxu0 0.0
    %237 = vmatprep.subr.mxu0 0.0
    %238 = vmatpush1.msra.mxu0 0.0
    %239 = vmatprep.subr.mxu0 0.0
    %240 = vmatpush1.msra.mxu0 0.0
    %241 = vmatprep.subr.mxu0 0.0
    %242 = vmatpush1.msra.mxu0 0.0
    %243 = vmatprep.subr.mxu0 0.0
    %244 = vmatpush1.msra.mxu0 0.0
    %245 = vmatprep.subr.mxu0 0.0
    %246 = vmatpush1.msra.mxu0 0.0
    %247 = vmatprep.subr.mxu0 0.0
    %248 = vmatpush1.msra.mxu0 0.0
    %249 = vmatprep.subr.mxu0 0.0
    %250 = vmatpush1.msra.mxu0 0.0
    %251 = vmatprep.subr.mxu0 0.0
    %252 = vmatpush1.msra.mxu0 0.0
    %253 = vmatprep.subr.mxu0 0.0
    %254 = vmatpush1.msra.mxu0 0.0
    %255 = vmatprep.subr.mxu0 0.0
    %256 = vmatpush1.msra.mxu0 0.0
    %257 = vmatprep.subr.mxu0 0.0
    %258 = vmatpush1.msra.mxu0 0.0
    %259 = vmatprep.subr.mxu0 0.0
    %260 = vmatpush1.msra.mxu0 0.0
    %261 = vmatprep.subr.mxu0 0.0
    %262 = vmatpush1.msra.mxu0 0.0
    %263 = vmatprep.subr.mxu0 0.0
    %264 = vmatpush1.msra.mxu0 0.0
    %265 = vmatprep.subr.mxu0 0.0
    %266 = vmatpush1.msra.mxu0 0.0
    %267 = vmatprep.subr.mxu0 0.0
    %268 = vmatpush1.msra.mxu0 0.0
    %269 = vmatprep.subr.mxu0 0.0
    %270 = vmatpush1.msra.mxu0 0.0
    %271 = vmatprep.subr.mxu0 0.0
    %272 = vmatpush1.msra.mxu0 0.0
    %273 = vmatprep.subr.mxu0 0.0
    %274 = vmatpush1.msra.mxu0 0.0
    %275 = vmatprep.subr.mxu0 0.0
    %276 = vmatpush1.msra.mxu0 0.0
    %277 = vmatprep.subr.mxu0 0.0
    %278 = vmatpush1.msra.mxu0 0.0
    %279 = vmatprep.subr.mxu0 0.0
    %280 = vmatpush1.msra.mxu0 0.0
    %281 = vmatprep.subr.mxu0 0.0
    %282 = vmatpush1.msra.mxu0 0.0
    %283 = vmatprep.subr.mxu0 0.0
    %284 = vmatpush1.msra.mxu0 0.0
    %285 = vmatprep.subr.mxu0 0.0
    %286 = vmatpush1.msra.mxu0 0.0
    %287 = vmatprep.subr.mxu0 0.0
    %288 = vmatpush1.msra.mxu0 0.0
    %289 = vmatprep.mubr.f32.mxu0 0.0
    %290 = vmatmul.mubr.f32.gmra.mrb[0].mxu0 %v223
    %v291 = vpop.f32.mrb[0].mxu0
    %v292 = vadd.f32 0.0, %v291
    %v293 = vpop.f32.mrb[0].mxu0
    %294 = vdwg.mxu0
    %295 = vst.msk [vmem:[#allocation7] sm:$0xff] %vm53, %v292
    // Predicated region
    $region22: #{tpu_custom_call.1} parent=1 // pred_check
      _
    $region23: #{tpu_custom_call.1} parent=1 // pred_check_branch
      %297 = sbr.rel (0) target = $region25
    $region24: #{tpu_custom_call.1} parent=1 // pred_region
      %s299 = ssub.s32 128, 128
      %300 = vsyncadd [#allocation4], %s299
      %s302 = sshll.u32 [#allocation7], 4
      %s303 = int_to_ptr.vmem [resolvable:$true] %s302
      %305 = dma.vmem_to_hbm [thread:$0]  %s303, 128, %s3, [#allocation4]
    $region25: #{tpu_custom_call.1} parent=1 // pred_fallthru
      _
    // Predicated region
    $region26: #{tpu_custom_call.1} parent=1 // pred_check
      _
    $region27: #{tpu_custom_call.1} parent=1 // pred_check_branch
      %307 = sbr.rel (0) target = $region29
    $region28: #{tpu_custom_call.1} parent=1 // pred_region
      %308 = dma.done [#allocation4], 128
    $region29: #{tpu_custom_call.1} parent=1 // pred_fallthru
      _
    %309 = vsyncpa [#allocation3], 1
    %310 = vsyncpa [#allocation6], 1
    %311 = vsyncpa [#allocation4], 1

</llo_original>
